<compile_context>
chip_gen: v7x
topology: tpu7x:2x2x1
jax: 0.10.0
libtpu: 0.0.40
codegen_flags: <defaults>
</compile_context>

<pallas_src>
import jax
import jax.numpy as jnp
from jax.experimental import pallas as pl
from jax.experimental.pallas import tpu as pltpu


def _round_up(x: int, m: int) -> int:
    return -(-x // m) * m


def _make_lookahead_kernel(T: int, context: int, use_roll: bool):
    halo = context - 1

    if use_roll:
        def kernel(x_ref, w_ref, o_ref):
            # x_ref : (T, bf_tile)                 input tile (full T)
            # w_ref : (n_tiles, context, bf_tile)  all per-lane taps, resident in VMEM
            # o_ref : (T, bf_tile)                 output tile
            j = pl.program_id(0)
            xv = x_ref[...]
            w32 = w_ref[j].astype(jnp.float32)            # (context, bf_tile), hoisted cast
            acc = xv.astype(jnp.float32) * w32[0:1, :]    # k = 0 term initializes the acc
            if halo > 0:
                rows = jax.lax.broadcasted_iota(jnp.int32, xv.shape, 0)   # hoisted
                zero = jnp.zeros_like(xv)                                  # hoisted
                for k in range(1, min(context, T)):       # small static context -> unrolled
                    # Row t of the rolled tile is x[(t + k) % T]; rows >= T - k wrapped
                    # around, so mask them to zero (the conv's implicit right padding).
                    shifted = pltpu.roll(xv, shift=T - k, axis=0)
                    shifted = jnp.where(rows < (T - k), shifted, zero)
                    acc = acc + shifted.astype(jnp.float32) * w32[k:k + 1, :]
            o_ref[...] = acc.astype(o_ref.dtype)

        return kernel

    def kernel(x_ref, w_ref, o_ref, xpad_ref):
        # Fallback for T % 8 != 0: previously-validated padded-VMEM-scratch path.
        j = pl.program_id(0)
        bf = x_ref.shape[1]
        xv = x_ref[...]
        xpad_ref[pl.ds(0, T), :] = xv
        if halo > 0:
            # Zero tail rewritten every step (cheap: halo rows only) so correctness holds
            # when the "parallel" grid is sharded across TensorCores.
            xpad_ref[pl.ds(T, halo), :] = jnp.zeros((halo, bf), xv.dtype)
        w32 = w_ref[j].astype(jnp.float32)
        acc = xv.astype(jnp.float32) * w32[0:1, :]
        for k in range(1, context):
            acc = acc + xpad_ref[pl.ds(k, T), :].astype(jnp.float32) * w32[k:k + 1, :]
        o_ref[...] = acc.astype(o_ref.dtype)

    return kernel


def _vmem_limit_bytes() -> int:
    """Generation-aware VMEM limit (v7x: 64 MiB / TC, v5e/v6e: 128 MiB physical)."""
    cap = 64 * 1024 * 1024  # conservative default = v7x per-core capacity
    try:
        cap = int(pltpu.get_tpu_info().vmem_capacity_bytes)
    except Exception:
        pass
    # ~70% of physical, capped: ~45 MiB on v7x, ~90 MiB on v5e/v6e.
    return max(32 * 1024 * 1024, min(int(cap * 0.70), 100 * 1024 * 1024))


def _pick_bf_tile(T: int, BF: int, itemsize: int, context: int,
                  use_roll: bool, vmem_limit: int) -> int:
    """Lane-dense B*F tile: as large as safely fits VMEM, but >=2 tiles for big problems
    so dimension_semantics=("parallel",) can shard across both TensorCores on v7x."""
    halo = context - 1
    # VMEM bytes per lane column of one block:
    #   2x input + 2x output (double-buffered)  +  f32 accumulator & live roll/upcast temps
    #   (+ the (T + halo)-row padded scratch on the fallback path)
    per_lane = 4 * T * itemsize + 12 * T
    if not use_roll:
        per_lane += (T + halo) * itemsize
    # Resident weight block (tiny) + headroom for compiler temporaries.
    weight_bytes = _round_up(context, 8) * (_round_up(BF, 128) + 2048) * 4
    budget = max(2 * 1024 * 1024, int(vmem_limit * 0.55) - weight_bytes)
    fit_tile = max(128, (budget // max(per_lane, 1)) // 128 * 128)

    if BF <= 128:
        return BF  # cannot split below one lane group; full-dim lane block is always legal
    big_enough = T * BF * itemsize >= (1 << 20)
    if big_enough:
        # Aim for >= 2 tiles (megacore on v7x; harmless on single-TC chips).
        target = max(128, _round_up(_round_up(BF, 2) // 2, 128))
        return min(target, fit_tile)
    # Small problem: single full-dim block if it fits, else 128-aligned tiles.
    if BF <= fit_tile:
        return BF
    return fit_tile


def lookahead(x, weight, context: int, bf_tile: int | None = None):
    """x: (T, B, F), weight: (F, context)  ->  (T, B, F).  Matches Lookahead.forward."""
    T, B, F = x.shape
    assert weight.shape == (F, context)
    assert context > 0

    BF = B * F
    halo = context - 1
    x2 = x.reshape(T, BF)                       # free reshape: lanes = B*F, sublanes = T
    use_roll = (context == 1) or (T % 8 == 0)   # scratch-free path needs 8-aligned sublane roll

    itemsize = jnp.dtype(x.dtype).itemsize
    vmem_limit = _vmem_limit_bytes()
    if bf_tile is None:
        bf_tile = _pick_bf_tile(T, BF, itemsize, context, use_roll, vmem_limit)
    assert bf_tile == BF or bf_tile % 128 == 0, "bf_tile must be full-width or a multiple of 128"

    n_tiles = pl.cdiv(BF, bf_tile)
    BF_pad = n_tiles * bf_tile

    # Per-lane taps: lane column b*F + f carries weight[f, :].  Tiny; built once, padded to
    # the tile grid, and kept resident in VMEM for the whole pallas_call.
    w_lanes = jnp.broadcast_to(jnp.transpose(weight, (1, 0))[:, None, :],
                               (context, B, F)).reshape(context, BF)
    if BF_pad != BF:
        w_lanes = jnp.pad(w_lanes, ((0, 0), (0, BF_pad - BF)))
    w_res = w_lanes.reshape(context, n_tiles, bf_tile).transpose(1, 0, 2)  # (n_tiles, ctx, tile)

    kernel = _make_lookahead_kernel(T, context, use_roll)
    scratch_shapes = [] if use_roll else [pltpu.VMEM((T + halo, bf_tile), x.dtype)]

    cost = pl.CostEstimate(
        flops=2 * context * T * BF,
        transcendentals=0,
        bytes_accessed=(2 * T * BF + context * BF) * itemsize,
    )

    out2 = pl.pallas_call(
        kernel,
        out_shape=jax.ShapeDtypeStruct((T, BF), x.dtype),
        grid_spec=pltpu.PrefetchScalarGridSpec(
            num_scalar_prefetch=0,
            grid=(n_tiles,),
            in_specs=[
                pl.BlockSpec((T, bf_tile), lambda j: (0, j)),                    # x tile, full T
                pl.BlockSpec((n_tiles, context, bf_tile), lambda j: (0, 0, 0)),  # resident taps
            ],
            out_specs=pl.BlockSpec((T, bf_tile), lambda j: (0, j)),
            scratch_shapes=scratch_shapes,
        ),
        compiler_params=pltpu.CompilerParams(
            dimension_semantics=("parallel",),      # tiles independent -> megacore on v7x
            vmem_limit_bytes=vmem_limit,
        ),
        cost_estimate=cost,
    )(x2, w_res)

    return out2.reshape(T, B, F)


def lookahead_reference(x, weight, context: int):
    """Pure-JAX reference of the PyTorch forward (for verification)."""
    T, B, F = x.shape
    xpad = jnp.pad(x, ((0, context - 1), (0, 0), (0, 0)))
    out = jnp.zeros((T, B, F), jnp.float32)
    for k in range(context):
        out = out + xpad[k:k + T].astype(jnp.float32) * weight[:, k][None, None, :]
    return out.astype(x.dtype)


if __name__ == "__main__":
    key = jax.random.PRNGKey(0)
    k1, k2, k3, k4, k5, k6 = jax.random.split(key, 6)

    # Case 1: module-scale demo (seq=8, batch=2, n_features=32, context=4).
    #         T % 8 == 0 -> scratch-free roll path, single full-width lane block.
    T, B, F, context = 8, 2, 32, 4
    x = jax.random.normal(k1, (T, B, F), dtype=jnp.float32)
    # PyTorch Conv1d weight is (F, 1, context), squeezed here to (F, context).
    weight = jax.random.normal(k2, (F, context), dtype=jnp.float32) * 0.1
    out = jax.block_until_ready(lookahead(x, weight, context))
    ref = lookahead_reference(x, weight, context)
    assert out.shape == (T, B, F)
    assert jnp.allclose(out, ref, atol=1e-5, rtol=1e-5)

    # Case 2: odd T (=17) -> validated padded-scratch fallback; forced 128-wide tiles
    #         (5 blocks, partial last lane block, masked edge stores).
    T2, B2, F2, c2 = 17, 3, 200, 3
    x2 = jax.random.normal(k3, (T2, B2, F2), dtype=jnp.float32)
    w2 = jax.random.normal(k4, (F2, c2), dtype=jnp.float32) * 0.1
    out2 = jax.block_until_ready(lookahead(x2, w2, c2, bf_tile=128))
    ref2 = lookahead_reference(x2, w2, c2)
    assert out2.shape == (T2, B2, F2)
    assert jnp.allclose(out2, ref2, atol=1e-5, rtol=1e-5)

    # Case 3: roll path with a multi-block grid and a partial last lane block
    #         (T=24, B*F=640, forced 256-wide tiles -> 3 blocks), resident weight indexing.
    T3, B3, F3, c3 = 24, 2, 320, 5
    x3 = jax.random.normal(k5, (T3, B3, F3), dtype=jnp.float32)
    wt3 = jax.random.normal(k6, (F3, c3), dtype=jnp.float32) * 0.1
    out3 = jax.block_until_ready(lookahead(x3, wt3, c3, bf_tile=256))
    ref3 = lookahead_reference(x3, wt3, c3)
    assert out3.shape == (T3, B3, F3)
    assert jnp.allclose(out3, ref3, atol=1e-5, rtol=1e-5)

    print("KERNEL_OK")
</pallas_src>

<mosaic_0001>
module attributes {stable_mosaic.version = 11 : i64} {
  func.func @kernel(%arg0: i32, %arg1: memref<8x64xf32, #tpu.memory_space<vmem>>, %arg2: memref<1x4x64xf32, #tpu.memory_space<vmem>>, %arg3: memref<8x64xf32, #tpu.memory_space<vmem>>) attributes {dimension_semantics = [#tpu.dimension_semantics<parallel>], iteration_bounds = array<i64: 1>, scalar_prefetch = 0 : i64, scratch_operands = 0 : i64, tpu.core_type = #tpu.core_type<tc>, window_params = [{transform_indices = @transform_0, window_bounds = array<i64: 8, 64>}, {pipeline_mode = #tpu.pipeline_mode<synchronous>, transform_indices = @transform_1, window_bounds = array<i64: 1, 4, 64>}, {transform_indices = @transform_2, window_bounds = array<i64: 8, 64>}]} {
    %c0 = arith.constant 0 : index
    %c0_0 = arith.constant 0 : index
    %0 = vector.load %arg1[%c0, %c0_0] : memref<8x64xf32, #tpu.memory_space<vmem>>, vector<8x64xf32>
    %1 = arith.index_cast %arg0 : i32 to index
    %c0_1 = arith.constant 0 : index
    %c0_2 = arith.constant 0 : index
    %2 = vector.load %arg2[%1, %c0_1, %c0_2] : memref<1x4x64xf32, #tpu.memory_space<vmem>>, vector<1x4x64xf32>
    %3 = vector.shape_cast %2 : vector<1x4x64xf32> to vector<4x64xf32>
    %4 = vector.extract_strided_slice %3 {offsets = [0, 0], sizes = [1, 64], strides = [1, 1]} : vector<4x64xf32> to vector<1x64xf32>
    %5 = vector.broadcast %4 : vector<1x64xf32> to vector<8x64xf32>
    %6 = arith.mulf %0, %5 : vector<8x64xf32>
    %7 = tpu.iota {dimensions = array<i32: 0>} : vector<8x64xi32>
    %cst = arith.constant 0.000000e+00 : f32
    %8 = vector.broadcast %cst : f32 to vector<8x64xf32>
    %c7_i32 = arith.constant 7 : i32
    %9 = tpu.dynamic_rotate %0 by %c7_i32 dim 0 : vector<8x64xf32>, i32 -> vector<8x64xf32>
    %c7_i32_3 = arith.constant 7 : i32
    %10 = vector.broadcast %c7_i32_3 : i32 to vector<8x64xi32>
    %11 = arith.cmpi slt, %7, %10 : vector<8x64xi32>
    %12 = arith.select %11, %9, %8 : vector<8x64xi1>, vector<8x64xf32>
    %13 = vector.extract_strided_slice %3 {offsets = [1, 0], sizes = [1, 64], strides = [1, 1]} : vector<4x64xf32> to vector<1x64xf32>
    %14 = vector.broadcast %13 : vector<1x64xf32> to vector<8x64xf32>
    %15 = arith.mulf %12, %14 : vector<8x64xf32>
    %16 = arith.addf %6, %15 : vector<8x64xf32>
    %c6_i32 = arith.constant 6 : i32
    %17 = tpu.dynamic_rotate %0 by %c6_i32 dim 0 : vector<8x64xf32>, i32 -> vector<8x64xf32>
    %c6_i32_4 = arith.constant 6 : i32
    %18 = vector.broadcast %c6_i32_4 : i32 to vector<8x64xi32>
    %19 = arith.cmpi slt, %7, %18 : vector<8x64xi32>
    %20 = arith.select %19, %17, %8 : vector<8x64xi1>, vector<8x64xf32>
    %21 = vector.extract_strided_slice %3 {offsets = [2, 0], sizes = [1, 64], strides = [1, 1]} : vector<4x64xf32> to vector<1x64xf32>
    %22 = vector.broadcast %21 : vector<1x64xf32> to vector<8x64xf32>
    %23 = arith.mulf %20, %22 : vector<8x64xf32>
    %24 = arith.addf %16, %23 : vector<8x64xf32>
    %c5_i32 = arith.constant 5 : i32
    %25 = tpu.dynamic_rotate %0 by %c5_i32 dim 0 : vector<8x64xf32>, i32 -> vector<8x64xf32>
    %c5_i32_5 = arith.constant 5 : i32
    %26 = vector.broadcast %c5_i32_5 : i32 to vector<8x64xi32>
    %27 = arith.cmpi slt, %7, %26 : vector<8x64xi32>
    %28 = arith.select %27, %25, %8 : vector<8x64xi1>, vector<8x64xf32>
    %29 = vector.extract_strided_slice %3 {offsets = [3, 0], sizes = [1, 64], strides = [1, 1]} : vector<4x64xf32> to vector<1x64xf32>
    %30 = vector.broadcast %29 : vector<1x64xf32> to vector<8x64xf32>
    %31 = arith.mulf %28, %30 : vector<8x64xf32>
    %32 = arith.addf %24, %31 : vector<8x64xf32>
    %c0_6 = arith.constant 0 : index
    %c0_7 = arith.constant 0 : index
    %33 = vector.load %arg3[%c0_6, %c0_7] : memref<8x64xf32, #tpu.memory_space<vmem>>, vector<8x64xf32>
    tpu.vector_store %arg3[%c0_6, %c0_7], %32 {strides = array<i32>} : memref<8x64xf32, #tpu.memory_space<vmem>>, vector<8x64xf32>,
    return
  }
  func.func @transform_0(%arg0: i32) -> (i32, i32) {
    %c0_i32 = arith.constant 0 : i32
    %c0_i32_0 = arith.constant 0 : i32
    return %c0_i32, %arg0 : i32, i32
  }
  func.func @transform_1(%arg0: i32) -> (i32, i32, i32) {
    %c0_i32 = arith.constant 0 : i32
    %c0_i32_0 = arith.constant 0 : i32
    %c0_i32_1 = arith.constant 0 : i32
    %c0_i32_2 = arith.constant 0 : i32
    return %c0_i32, %c0_i32_0, %c0_i32_1 : i32, i32, i32
  }
  func.func @transform_2(%arg0: i32) -> (i32, i32) {
    %c0_i32 = arith.constant 0 : i32
    %c0_i32_0 = arith.constant 0 : i32
    return %c0_i32, %arg0 : i32, i32
  }
}

</mosaic_0001>

<llo_original>
// kernel: tpu_custom_call.1
$region0: #{tpu_custom_call.1}
  #allocation0 [shape = 'u32[]', space=smem, size = 0x4, offset = 0x4, fixed_abs, tag = 'smem constant byte address 0x4 - core index']
  #allocation1 [shape = 'u32[144,128]{1,0:T(1,128)}', space=vmem, size = 0x12000, scoped, tag = 'internal scratch']
  %s0 = inlined_call_operand.hbm [shape: f32[8,64], index: 0, kind: input, shape index: {}]
  %s1 = inlined_call_operand.hbm [shape: f32[1,4,64], index: 1, kind: input, shape index: {}]
  %s2 = inlined_call_operand.hbm [shape: f32[8,64], index: 2, kind: output, shape index: {}]
  %s3 = sld [smem:[#allocation0]]
  $region26: #{tpu_custom_call.1} parent=0
    _
  %s5 = ssub.s32 1, %s3
  %s6 = scalar_select 0, %s5, %s3
  $region1: #{tpu_custom_call.1} parent=0
    #allocation2 [shape = 'u8[4096]{0}', space=vmem, size = 0x1000, scoped, tag = 'input window, operand 0, single buffered']
    #allocation3 [shape = 's32[1]{0}', space=sflag, size = 0x4, scoped, tag = 'scoped memory for tpu_custom_call.1']
    #allocation4 [shape = 's32[1]{0}', space=sflag, size = 0x4, scoped, tag = 'scoped memory for tpu_custom_call.1']
    #allocation5 [shape = 'u8[2048]{0}', space=vmem, size = 0x800, scoped, tag = 'input window, operand 1, single buffered']
    #allocation6 [shape = 's32[1]{0}', space=sflag, size = 0x4, scoped, tag = 'scoped memory for tpu_custom_call.1']
    #allocation7 [shape = 'u8[4096]{0}', space=vmem, size = 0x1000, scoped, tag = 'output window, operand 0, single buffered']
    %7 = vsyncpa [#allocation3], 0
    %8 = vsyncpa [#allocation6], 0
    %9 = vsyncpa [#allocation4], 0
    // Predicated region
    $region2: #{tpu_custom_call.1} parent=1 // pred_check
      _
    $region3: #{tpu_custom_call.1} parent=1 // pred_check_branch
      %11 = sbr.rel (0) target = $region5
    $region4: #{tpu_custom_call.1} parent=1 // pred_region
      %s13 = ssub.s32 128, 128
      %14 = vsyncadd [#allocation3], %s13
      %s16 = sshll.u32 [#allocation2], 4
      %s17 = int_to_ptr.vmem [resolvable:$true] %s16
      %19 = dma.hbm_to_vmem [thread:$0]  %s0, 128, %s17, [#allocation3]
    $region5: #{tpu_custom_call.1} parent=1 // pred_fallthru
      _
    // Predicated region
    $region6: #{tpu_custom_call.1} parent=1 // pred_check
      _
    $region7: #{tpu_custom_call.1} parent=1 // pred_check_branch
      %21 = sbr.rel (0) target = $region9
    $region8: #{tpu_custom_call.1} parent=1 // pred_region
      %s23 = ssub.s32 64, 64
      %24 = vsyncadd [#allocation6], %s23
      %s26 = sshll.u32 [#allocation5], 4
      %s27 = int_to_ptr.vmem [resolvable:$true] %s26
      %29 = dma.hbm_to_vmem [thread:$0]  %s1, 64, %s27, [#allocation6]
    $region9: #{tpu_custom_call.1} parent=1 // pred_fallthru
      _
    // Predicated region
    $region10: #{tpu_custom_call.1} parent=1 // pred_check
      _
    $region11: #{tpu_custom_call.1} parent=1 // pred_check_branch
      %31 = sbr.rel (0) target = $region13
    $region12: #{tpu_custom_call.1} parent=1 // pred_region
      %32 = dma.done [#allocation3], 128
    $region13: #{tpu_custom_call.1} parent=1 // pred_fallthru
      _
    // Predicated region
    $region14: #{tpu_custom_call.1} parent=1 // pred_check
      _
    $region15: #{tpu_custom_call.1} parent=1 // pred_check_branch
      %34 = sbr.rel (0) target = $region17
    $region16: #{tpu_custom_call.1} parent=1 // pred_region
      %35 = dma.done [#allocation6], 64
    $region17: #{tpu_custom_call.1} parent=1 // pred_fallthru
      _
    %v36 = vld [vmem:[#allocation2] sm:$0xff]
    %s37 = smul.u32 0, 4
    %s38 = scalar_lea.vmem [#allocation5], %s37
    %v39 = vld [vmem:[%s38] sm:$0xf]
    %v40 = vlaneseq
    %v41 = vshrl.u32 %v40, 7
    %v42 = vsub.s32 0, %v41
    %v43 = vrot.slane %v39, %v42
    %v44 = vmul.f32 %v36, %v43
    %v45 = vlaneseq
    %v46 = vshrl.u32 %v45, 7
    %v47 = vrot.slane %v36, 1
    %vm48 = vcmp.lt.s32.totalorder %v46, 7
    %v49 = vsel %vm48, %v47, 0.0
    %v50 = vlaneseq
    %v51 = vshrl.u32 %v50, 7
    %v52 = vsub.s32 1, %v51
    %v53 = vrot.slane %v39, %v52
    %v54 = vmul.f32 %v49, %v53
    %v55 = vadd.f32 %v44, %v54
    %v56 = vrot.slane %v36, 2
    %vm57 = vcmp.lt.s32.totalorder %v46, 6
    %v58 = vsel %vm57, %v56, 0.0
    %v59 = vlaneseq
    %v60 = vshrl.u32 %v59, 7
    %v61 = vsub.s32 2, %v60
    %v62 = vrot.slane %v39, %v61
    %v63 = vmul.f32 %v58, %v62
    %v64 = vadd.f32 %v55, %v63
    %v65 = vrot.slane %v36, 3
    %vm66 = vcmp.lt.s32.totalorder %v46, 5
    %v67 = vsel %vm66, %v65, 0.0
    %v68 = vlaneseq
    %v69 = vshrl.u32 %v68, 7
    %v70 = vsub.s32 3, %v69
    %v71 = vrot.slane %v39, %v70
    %v72 = vmul.f32 %v67, %v71
    %v73 = vadd.f32 %v64, %v72
    %vm74 = vcmask 523264
    %75 = vst.msk [vmem:[#allocation7] sm:$0xff] %vm74, %v73
    // Predicated region
    $region18: #{tpu_custom_call.1} parent=1 // pred_check
      _
    $region19: #{tpu_custom_call.1} parent=1 // pred_check_branch
      %77 = sbr.rel (0) target = $region21
    $region20: #{tpu_custom_call.1} parent=1 // pred_region
      %s79 = ssub.s32 128, 128
      %80 = vsyncadd [#allocation4], %s79
      %s82 = sshll.u32 [#allocation7], 4
      %s83 = int_to_ptr.vmem [resolvable:$true] %s82
      %85 = dma.vmem_to_hbm [thread:$0]  %s83, 128, %s2, [#allocation4]
    $region21: #{tpu_custom_call.1} parent=1 // pred_fallthru
      _
    // Predicated region
    $region22: #{tpu_custom_call.1} parent=1 // pred_check
      _
    $region23: #{tpu_custom_call.1} parent=1 // pred_check_branch
      %87 = sbr.rel (0) target = $region25
    $region24: #{tpu_custom_call.1} parent=1 // pred_region
      %88 = dma.done [#allocation4], 128
    $region25: #{tpu_custom_call.1} parent=1 // pred_fallthru
      _
    %89 = vsyncpa [#allocation3], 1
    %90 = vsyncpa [#allocation6], 1
    %91 = vsyncpa [#allocation4], 1

</llo_original>
